<compile_context>
chip_gen: v5e
topology: v5e:2x2
jax: 0.10.0
libtpu: 0.0.40
codegen_flags: <defaults>
</compile_context>

<pallas_src>
import math

import jax
import jax.numpy as jnp
from jax.experimental import pallas as pl
from jax.experimental.pallas import tpu as pltpu


LANE = 128      # lane (last-dim) tile width
SUB_BF16 = 16   # bf16 sublane packing
SUB_F32 = 8     # f32 sublane packing
HALF_PI = math.pi / 2.0


def _round_up(x, m):
    return (x + m - 1) // m * m


def _cdiv(a, b):
    return -(-a // b)


# --------------------------------------------------------------------------
# Parameter packing: one bf16 weight slab + one f32 bias slab.
# --------------------------------------------------------------------------
def pack_params(params, input_dim, compute_dtype=jnp.bfloat16):
    """Pack [(W_i, b_i)] (W: (in, out), b: (1, out)) into two VMEM slabs.

    Layout (all zero-padded; zeros propagate exactly through linear + relu^2):
      * layer 0: 2*in0_pad rows — rows [0:input_dim] = sin-half of W0,
        rows [in0_pad : in0_pad+input_dim] = cos-half, so the kernel can feed
        sin(concat([x, x + pi/2])) with a single K=2*in0_pad dot.
      * hidden layers: act_width rows each (act_width = round_up(max hidden
        width, 128)), full act_width columns.
      * last layer: act_width rows, but only out_width = round_up(out_dim,128)
        meaningful columns; the kernel slices `[:, :out_width]` so the output
        slab (and HBM writeback) is narrow.
    """
    n_layers = len(params)
    out_dim = params[-1][0].shape[1]
    out_width = _round_up(out_dim, LANE)
    if n_layers > 1:
        act_width = _round_up(max(w.shape[1] for w, _ in params[:-1]), LANE)
        slab_width = max(act_width, out_width)
    else:
        act_width = out_width
        slab_width = out_width
    in0_pad = _round_up(input_dim, SUB_BF16)

    w0, _ = params[0]
    assert w0.shape[0] == 2 * input_dim, "layer 0 expects 2*input_dim inputs"

    segments = []
    offsets = []   # (row_start, n_rows(K), col_width(N)) per layer, static

    # Layer 0: combined sin/cos segment (2*in0_pad rows).
    col0 = act_width if n_layers > 1 else out_width
    seg0 = jnp.zeros((2 * in0_pad, slab_width), jnp.float32)
    seg0 = seg0.at[:input_dim, :w0.shape[1]].set(w0[:input_dim].astype(jnp.float32))
    seg0 = seg0.at[in0_pad:in0_pad + input_dim, :w0.shape[1]].set(
        w0[input_dim:].astype(jnp.float32))
    segments.append(seg0)
    offsets.append((0, 2 * in0_pad, col0))
    row = 2 * in0_pad

    for i in range(1, n_layers):
        w, _ = params[i]
        assert w.shape[0] == params[i - 1][0].shape[1]
        cw = act_width if i < n_layers - 1 else out_width
        seg = jnp.zeros((act_width, slab_width), jnp.float32)
        seg = seg.at[:w.shape[0], :w.shape[1]].set(w.astype(jnp.float32))
        segments.append(seg)
        offsets.append((row, act_width, cw))
        row += act_width

    w_slab = jnp.concatenate(segments, axis=0).astype(compute_dtype)

    b_rows = _round_up(n_layers, SUB_F32)
    b_slab = jnp.zeros((b_rows, slab_width), jnp.float32)
    for i, (_, b) in enumerate(params):
        bv = jnp.reshape(b, (-1,)).astype(jnp.float32)
        b_slab = b_slab.at[i, : bv.shape[0]].set(bv)

    meta = dict(
        n_layers=n_layers,
        input_dim=input_dim,
        in0_pad=in0_pad,
        act_width=act_width,
        out_width=out_width,
        slab_width=slab_width,
        out_dim=out_dim,
        offsets=tuple(offsets),
        compute_dtype=compute_dtype,
    )
    return w_slab, b_slab, meta


# --------------------------------------------------------------------------
# Kernel
# --------------------------------------------------------------------------
def _make_kernel(meta):
    n_layers = meta["n_layers"]
    offsets = meta["offsets"]
    cdtype = meta["compute_dtype"]

    def kernel(x_ref, w_ref, b_ref, o_ref):
        # One EUP pass: cos(x) == sin(x + pi/2).  The lane concat stays inside
        # a single vreg group (cheap XLU shuffle, no cross-vreg concat of
        # post-trig features).  Padded lanes (sin(0)=0, sin(pi/2)=1) multiply
        # zero-padded weight rows, so padding is exact.
        x = x_ref[...].astype(jnp.float32)
        feats = jnp.sin(jnp.concatenate([x, x + HALF_PI], axis=-1)).astype(cdtype)

        r0, n0, c0 = offsets[0]
        h = (jnp.dot(feats, w_ref[r0:r0 + n0, :c0],
                     preferred_element_type=jnp.float32)
             + b_ref[0:1, :c0])

        # Hidden layers: squared ReLU in f32 (VPU), bf16 MXU feed, f32 acc.
        for i in range(1, n_layers):
            a = jnp.maximum(h, 0.0)
            a = (a * a).astype(cdtype)
            ro, nr, cw = offsets[i]
            h = (jnp.dot(a, w_ref[ro:ro + nr, :cw],
                         preferred_element_type=jnp.float32)
                 + b_ref[i:i + 1, :cw])

        # Narrow (TB, out_width) store; wrapper slices to the real out_dim.
        o_ref[...] = h.astype(o_ref.dtype)

    return kernel


# --------------------------------------------------------------------------
# Batch tiling
# --------------------------------------------------------------------------
def _choose_batch_tile(batch, *, tb_max=1024, target_parallel=2):
    """Remainder-aware batch tile.

    * enough tiles that each tile is <= tb_max (large tiles -> HBM efficiency,
      amortized per-step overhead on v5e/v6e),
    * tile count is a multiple of `target_parallel` when the batch is large
      enough, so v7x's two TensorCores both get work on the "parallel" axis,
    * tile rounded to the f32 sublane (8) so padding waste is minimal
      (e.g. batch=520 -> 2 tiles of 264, not one 1024 tile).
    """
    n = max(1, _cdiv(batch, tb_max))
    if batch >= target_parallel * SUB_F32:
        n = max(n, target_parallel)
        n = _cdiv(n, target_parallel) * target_parallel
    return _round_up(_cdiv(batch, n), SUB_F32)


# --------------------------------------------------------------------------
# Wrapper
# --------------------------------------------------------------------------
def mlp_sqrelu_trig(x, w_slab, b_slab, meta, *, batch_tile=None, tb_max=1024,
                    target_parallel=2, store_dtype=jnp.bfloat16, out_dtype=None):
    in0_pad = meta["in0_pad"]
    out_width = meta["out_width"]
    out_dim = meta["out_dim"]
    slab_width = meta["slab_width"]
    offsets = meta["offsets"]
    if out_dtype is None:
        out_dtype = x.dtype

    batch = x.shape[0]
    # Pad the feature dim to match the packed layer-0 rows (exact: padded
    # lanes hit zero weight rows).
    if x.shape[1] != in0_pad:
        x = jnp.pad(x, ((0, 0), (0, in0_pad - x.shape[1])))

    if batch_tile is None:
        batch_tile = _choose_batch_tile(batch, tb_max=tb_max,
                                        target_parallel=target_parallel)
    batch_p = _round_up(batch, batch_tile)
    if batch_p != batch:
        x = jnp.pad(x, ((0, batch_p - batch), (0, 0)))
    n_tiles = batch_p // batch_tile

    w_bytes = w_slab.size * w_slab.dtype.itemsize
    b_bytes = b_slab.size * b_slab.dtype.itemsize
    store_bytes = jnp.dtype(store_dtype).itemsize

    # Advisory cost estimate so XLA schedules the surrounding graph sensibly.
    flops_per_row = sum(2 * nr * cw for _, nr, cw in offsets)
    cost = pl.CostEstimate(
        flops=int(batch_p * flops_per_row),
        transcendentals=int(batch_p * 2 * in0_pad),
        bytes_accessed=int(batch_p * in0_pad * 4 + w_bytes + b_bytes
                           + batch_p * out_width * store_bytes),
    )

    # Explicit VMEM budget: single-buffered weight/bias slabs + double-buffered
    # x / out blocks + f32 activation temporaries, with headroom.  Raises v5e's
    # 16 MiB scoped default; capped at v7x's 64 MiB physical VMEM.
    est = (w_bytes + b_bytes
           + 2 * batch_tile * in0_pad * 4
           + 2 * batch_tile * out_width * store_bytes
           + 6 * batch_tile * max(slab_width, 2 * in0_pad) * 4)
    vmem_limit = int(min(max(32 << 20, 2 * est), 64 << 20))

    kernel = _make_kernel(meta)
    out_padded = pl.pallas_call(
        kernel,
        out_shape=jax.ShapeDtypeStruct((batch_p, out_width), store_dtype),
        grid=(n_tiles,),
        in_specs=[
            # Activations: pipelined / megacore-shardable along the batch.
            pl.BlockSpec((batch_tile, in0_pad), lambda i: (i, 0)),
            # Weight / bias slabs: constant index map -> resident; single
            # buffer (double-buffering constants only doubles resident VMEM).
            pl.BlockSpec(w_slab.shape, lambda i: (0, 0),
                         pipeline_mode=pl.Buffered(1)),
            pl.BlockSpec(b_slab.shape, lambda i: (0, 0),
                         pipeline_mode=pl.Buffered(1)),
        ],
        out_specs=pl.BlockSpec((batch_tile, out_width), lambda i: (i, 0)),
        compiler_params=pltpu.CompilerParams(
            dimension_semantics=("parallel",),
            vmem_limit_bytes=vmem_limit,
        ),
        cost_estimate=cost,
    )(x, w_slab, b_slab)

    # Kernel writes a narrow bf16 slab (halved HBM writeback); slice + cast to
    # the caller-facing dtype here (cheap, on the small final view).
    return out_padded[:batch, :out_dim].astype(out_dtype)


# --------------------------------------------------------------------------
# Init + f32 reference (mirrors the PyTorch module)
# --------------------------------------------------------------------------
def init_params(key, input_dim, hidden_dims, output_dim):
    """PyTorch-Linear-style init: U(-1/sqrt(fan_in), 1/sqrt(fan_in))."""
    dims = [input_dim * 2] + list(hidden_dims) + [output_dim]
    params = []
    for i in range(len(dims) - 1):
        fan_in, fan_out = dims[i], dims[i + 1]
        key, kw, kb = jax.random.split(key, 3)
        bound = 1.0 / jnp.sqrt(fan_in)
        w = jax.random.uniform(kw, (fan_in, fan_out), jnp.float32, -bound, bound)
        b = jax.random.uniform(kb, (1, fan_out), jnp.float32, -bound, bound)
        params.append((w, b))
    return params


def reference_forward(x, params):
    h = jnp.concatenate([jnp.sin(x), jnp.cos(x)], axis=1)
    n = len(params)
    for i, (w, b) in enumerate(params):
        h = h @ w + b
        if i < n - 1:
            h = jnp.maximum(h, 0.0) ** 2
    return h


if __name__ == "__main__":
    key = jax.random.PRNGKey(0)

    # --- Small config (module's toy sizes) -------------------------------
    batch, input_dim, hidden_dims, output_dim = 8, 16, [32, 32], 8
    key, kx, kp = jax.random.split(key, 3)
    x = jax.random.normal(kx, (batch, input_dim), dtype=jnp.float32)
    params = init_params(kp, input_dim, hidden_dims, output_dim)
    w_slab, b_slab, meta = pack_params(params, input_dim)

    out = jax.block_until_ready(mlp_sqrelu_trig(x, w_slab, b_slab, meta))
    ref = reference_forward(x, params)
    assert out.shape == (batch, output_dim)
    # bf16 MXU feed + bf16 output store (f32 accumulate) -> relaxed tolerance.
    assert jnp.allclose(out, ref, atol=2e-2, rtol=2e-2), "mismatch (small cfg)"

    # --- Larger config: exercises narrow-output slab (out_width < hidden
    # width), padded input_dim, and remainder-aware multi-tile batch. -------
    batch2, input_dim2, hidden_dims2, output_dim2 = 300, 12, [256, 256], 10
    key, kx2, kp2 = jax.random.split(key, 3)
    x2 = jax.random.normal(kx2, (batch2, input_dim2), dtype=jnp.float32)
    params2 = init_params(kp2, input_dim2, hidden_dims2, output_dim2)
    w_slab2, b_slab2, meta2 = pack_params(params2, input_dim2)

    out2 = jax.block_until_ready(mlp_sqrelu_trig(x2, w_slab2, b_slab2, meta2))
    ref2 = reference_forward(x2, params2)
    assert out2.shape == (batch2, output_dim2)
    assert jnp.allclose(out2, ref2, atol=3e-2, rtol=3e-2), "mismatch (large cfg)"

    print("KERNEL_OK")
</pallas_src>

<mosaic_0001>
module attributes {stable_mosaic.version = 11 : i64} {
  func.func @kernel(%arg0: i32, %arg1: memref<8x16xf32, #tpu.memory_space<vmem>>, %arg2: memref<288x128xbf16, #tpu.memory_space<vmem>>, %arg3: memref<8x128xf32, #tpu.memory_space<vmem>>, %arg4: memref<8x128xbf16, #tpu.memory_space<vmem>>) attributes {dimension_semantics = [#tpu.dimension_semantics<parallel>], iteration_bounds = array<i64: 1>, scalar_prefetch = 0 : i64, scratch_operands = 0 : i64, tpu.core_type = #tpu.core_type<tc>, window_params = [{transform_indices = @transform_0, window_bounds = array<i64: 8, 16>}, {pipeline_mode = #tpu.pipeline_mode<synchronous>, transform_indices = @transform_1, window_bounds = array<i64: 288, 128>}, {pipeline_mode = #tpu.pipeline_mode<synchronous>, transform_indices = @transform_2, window_bounds = array<i64: 8, 128>}, {transform_indices = @transform_3, window_bounds = array<i64: 8, 128>}]} {
    %c0 = arith.constant 0 : index
    %c0_0 = arith.constant 0 : index
    %0 = vector.load %arg1[%c0, %c0_0] : memref<8x16xf32, #tpu.memory_space<vmem>>, vector<8x16xf32>
    %cst = arith.constant 1.57079637 : f32
    %1 = vector.broadcast %cst : f32 to vector<8x16xf32>
    %2 = arith.addf %0, %1 : vector<8x16xf32>
    %3 = tpu.concatenate %0, %2 in 1 : vector<8x16xf32>, vector<8x16xf32> -> vector<8x32xf32>
    %4 = math.sin %3 : vector<8x32xf32>
    %5 = arith.truncf %4 : vector<8x32xf32> to vector<8x32xbf16>
    %c0_1 = arith.constant 0 : index
    %c0_2 = arith.constant 0 : index
    %6 = vector.load %arg2[%c0_1, %c0_2] : memref<288x128xbf16, #tpu.memory_space<vmem>>, vector<32x128xbf16>
    %cst_3 = arith.constant dense<0.000000e+00> : vector<8x128xf32>
    %7 = tpu.matmul %5, %6, %cst_3 {dimension_numbers = #tpu.dot_dimension_numbers<[1], [0], [0], [1], [0, 0, 1, 1], [], []>} : vector<8x32xbf16>, vector<32x128xbf16>, vector<8x128xf32> -> vector<8x128xf32>
    %c0_4 = arith.constant 0 : index
    %c0_5 = arith.constant 0 : index
    %8 = vector.load %arg3[%c0_4, %c0_5] : memref<8x128xf32, #tpu.memory_space<vmem>>, vector<1x128xf32>
    %9 = vector.broadcast %8 : vector<1x128xf32> to vector<8x128xf32>
    %10 = arith.addf %7, %9 : vector<8x128xf32>
    %cst_6 = arith.constant 0.000000e+00 : f32
    %11 = vector.broadcast %cst_6 : f32 to vector<8x128xf32>
    %12 = arith.maximumf %10, %11 : vector<8x128xf32>
    %13 = arith.mulf %12, %12 : vector<8x128xf32>
    %14 = arith.truncf %13 : vector<8x128xf32> to vector<8x128xbf16>
    %c32 = arith.constant 32 : index
    %c0_7 = arith.constant 0 : index
    %15 = vector.load %arg2[%c32, %c0_7] : memref<288x128xbf16, #tpu.memory_space<vmem>>, vector<128x128xbf16>
    %cst_8 = arith.constant dense<0.000000e+00> : vector<8x128xf32>
    %16 = tpu.matmul %14, %15, %cst_8 {dimension_numbers = #tpu.dot_dimension_numbers<[1], [0], [0], [1], [0, 0, 1, 1], [], []>} : vector<8x128xbf16>, vector<128x128xbf16>, vector<8x128xf32> -> vector<8x128xf32>
    %c1 = arith.constant 1 : index
    %c0_9 = arith.constant 0 : index
    %17 = vector.load %arg3[%c1, %c0_9] : memref<8x128xf32, #tpu.memory_space<vmem>>, vector<1x128xf32>
    %18 = vector.broadcast %17 : vector<1x128xf32> to vector<8x128xf32>
    %19 = arith.addf %16, %18 : vector<8x128xf32>
    %cst_10 = arith.constant 0.000000e+00 : f32
    %20 = vector.broadcast %cst_10 : f32 to vector<8x128xf32>
    %21 = arith.maximumf %19, %20 : vector<8x128xf32>
    %22 = arith.mulf %21, %21 : vector<8x128xf32>
    %23 = arith.truncf %22 : vector<8x128xf32> to vector<8x128xbf16>
    %c160 = arith.constant 160 : index
    %c0_11 = arith.constant 0 : index
    %24 = vector.load %arg2[%c160, %c0_11] : memref<288x128xbf16, #tpu.memory_space<vmem>>, vector<128x128xbf16>
    %cst_12 = arith.constant dense<0.000000e+00> : vector<8x128xf32>
    %25 = tpu.matmul %23, %24, %cst_12 {dimension_numbers = #tpu.dot_dimension_numbers<[1], [0], [0], [1], [0, 0, 1, 1], [], []>} : vector<8x128xbf16>, vector<128x128xbf16>, vector<8x128xf32> -> vector<8x128xf32>
    %c2 = arith.constant 2 : index
    %c0_13 = arith.constant 0 : index
    %26 = vector.load %arg3[%c2, %c0_13] : memref<8x128xf32, #tpu.memory_space<vmem>>, vector<1x128xf32>
    %27 = vector.broadcast %26 : vector<1x128xf32> to vector<8x128xf32>
    %28 = arith.addf %25, %27 : vector<8x128xf32>
    %29 = arith.truncf %28 : vector<8x128xf32> to vector<8x128xbf16>
    %c0_14 = arith.constant 0 : index
    %c0_15 = arith.constant 0 : index
    %30 = vector.load %arg4[%c0_14, %c0_15] : memref<8x128xbf16, #tpu.memory_space<vmem>>, vector<8x128xbf16>
    tpu.vector_store %arg4[%c0_14, %c0_15], %29 {strides = array<i32>} : memref<8x128xbf16, #tpu.memory_space<vmem>>, vector<8x128xbf16>,
    return
  }
  func.func @transform_0(%arg0: i32) -> (i32, i32) {
    %c0_i32 = arith.constant 0 : i32
    %c0_i32_0 = arith.constant 0 : i32
    return %arg0, %c0_i32 : i32, i32
  }
  func.func @transform_1(%arg0: i32) -> (i32, i32) {
    %c0_i32 = arith.constant 0 : i32
    %c0_i32_0 = arith.constant 0 : i32
    %c0_i32_1 = arith.constant 0 : i32
    return %c0_i32, %c0_i32_0 : i32, i32
  }
  func.func @transform_2(%arg0: i32) -> (i32, i32) {
    %c0_i32 = arith.constant 0 : i32
    %c0_i32_0 = arith.constant 0 : i32
    %c0_i32_1 = arith.constant 0 : i32
    return %c0_i32, %c0_i32_0 : i32, i32
  }
  func.func @transform_3(%arg0: i32) -> (i32, i32) {
    %c0_i32 = arith.constant 0 : i32
    %c0_i32_0 = arith.constant 0 : i32
    return %arg0, %c0_i32 : i32, i32
  }
}

</mosaic_0001>

<llo_original>
// kernel: tpu_custom_call.1
$region0: #{tpu_custom_call.1}
  #allocation0 [shape = 'u32[]', space=smem, size = 0x4, offset = 0x4, fixed_abs, tag = 'smem constant byte address 0x4 - core index']
  #allocation1 [shape = 'u32[72,128]{1,0:T(1,128)}', space=vmem, size = 0x9000, scoped, tag = 'internal scratch']
  %s0 = inlined_call_operand.hbm [shape: f32[8,16], index: 0, kind: input, shape index: {}]
  %s1 = inlined_call_operand.hbm [shape: bf16[288,128], index: 1, kind: input, shape index: {}]
  %s2 = inlined_call_operand.hbm [shape: f32[8,128], index: 2, kind: input, shape index: {}]
  %s3 = inlined_call_operand.hbm [shape: bf16[8,128], index: 3, kind: output, shape index: {}]
  %s4 = sld [smem:[#allocation0]]
  $region34: #{tpu_custom_call.1} parent=0
    _
  %s6 = ssub.s32 1, %s4
  %s7 = scalar_select 0, %s6, %s4
  $region1: #{tpu_custom_call.1} parent=0
    #allocation2 [shape = 'u8[4096]{0}', space=vmem, size = 0x1000, scoped, tag = 'input window, operand 0, single buffered']
    #allocation3 [shape = 's32[1]{0}', space=sflag, size = 0x4, scoped, tag = 'scoped memory for tpu_custom_call.1']
    #allocation4 [shape = 's32[1]{0}', space=sflag, size = 0x4, scoped, tag = 'scoped memory for tpu_custom_call.1']
    #allocation5 [shape = 'u8[73728]{0}', space=vmem, size = 0x12000, scoped, tag = 'input window, operand 1, single buffered']
    #allocation6 [shape = 's32[1]{0}', space=sflag, size = 0x4, scoped, tag = 'scoped memory for tpu_custom_call.1']
    #allocation7 [shape = 'u8[4096]{0}', space=vmem, size = 0x1000, scoped, tag = 'input window, operand 2, single buffered']
    #allocation8 [shape = 'u8[2048]{0}', space=vmem, size = 0x800, scoped, tag = 'output window, operand 0, single buffered']
    %8 = vsyncpa [#allocation3], 0
    %9 = vsyncpa [#allocation6], 0
    %10 = vsyncpa [#allocation4], 0
    // Predicated region
    $region2: #{tpu_custom_call.1} parent=1 // pred_check
      _
    $region3: #{tpu_custom_call.1} parent=1 // pred_check_branch
      %12 = sbr.rel (0) target = $region5
    $region4: #{tpu_custom_call.1} parent=1 // pred_region
      %14 = vsyncadd [#allocation3], 0
      %s16 = sshll.u32 %s0, 4
      %s17 = int_to_ptr.hbm [resolvable:$true] %s16
      %s18 = sshll.u32 [#allocation2], 4
      %s19 = int_to_ptr.vmem [resolvable:$true] %s18
      %21 = dma.hbm_to_vmem [thread:$0]  %s17, 128, %s19, [#allocation3]
    $region5: #{tpu_custom_call.1} parent=1 // pred_fallthru
      _
    // Predicated region
    $region6: #{tpu_custom_call.1} parent=1 // pred_check
      _
    $region7: #{tpu_custom_call.1} parent=1 // pred_check_branch
      %23 = sbr.rel (0) target = $region9
    $region8: #{tpu_custom_call.1} parent=1 // pred_region
      %25 = vsyncadd [#allocation6], 0
      %s26 = sshll.u32 %s1, 4
      %s27 = int_to_ptr.hbm [resolvable:$true] %s26
      %s28 = sshll.u32 [#allocation5], 4
      %s29 = int_to_ptr.vmem [resolvable:$true] %s28
      %34 = dma.hbm_to_vmem [thread:$0]  %s27, 2304, %s29, [#allocation6], 64, 64, 4
    $region9: #{tpu_custom_call.1} parent=1 // pred_fallthru
      _
    // Predicated region
    $region10: #{tpu_custom_call.1} parent=1 // pred_check
      _
    $region11: #{tpu_custom_call.1} parent=1 // pred_check_branch
      %36 = sbr.rel (0) target = $region13
    $region12: #{tpu_custom_call.1} parent=1 // pred_region
      %38 = vsyncadd [#allocation6], 0
      %s40 = sshll.u32 %s2, 4
      %s41 = int_to_ptr.hbm [resolvable:$true] %s40
      %s42 = sshll.u32 [#allocation7], 4
      %s43 = int_to_ptr.vmem [resolvable:$true] %s42
      %45 = dma.hbm_to_vmem [thread:$0]  %s41, 128, %s43, [#allocation6]
    $region13: #{tpu_custom_call.1} parent=1 // pred_fallthru
      _
    // Predicated region
    $region14: #{tpu_custom_call.1} parent=1 // pred_check
      _
    $region15: #{tpu_custom_call.1} parent=1 // pred_check_branch
      %47 = sbr.rel (0) target = $region17
    $region16: #{tpu_custom_call.1} parent=1 // pred_region
      %49 = dma.done [#allocation3], 128
    $region17: #{tpu_custom_call.1} parent=1 // pred_fallthru
      _
    // Predicated region
    $region18: #{tpu_custom_call.1} parent=1 // pred_check
      _
    $region19: #{tpu_custom_call.1} parent=1 // pred_check_branch
      %51 = sbr.rel (0) target = $region21
    $region20: #{tpu_custom_call.1} parent=1 // pred_region
      %53 = dma.done [#allocation6], 2304
    $region21: #{tpu_custom_call.1} parent=1 // pred_fallthru
      _
    // Predicated region
    $region22: #{tpu_custom_call.1} parent=1 // pred_check
      _
    $region23: #{tpu_custom_call.1} parent=1 // pred_check_branch
      %55 = sbr.rel (0) target = $region25
    $region24: #{tpu_custom_call.1} parent=1 // pred_region
      %57 = dma.done [#allocation6], 128
    $region25: #{tpu_custom_call.1} parent=1 // pred_fallthru
      _
    %v59 = vld [vmem:[#allocation2] sm:$0xff]
    %v60 = vadd.f32 %v59, 1.5707964
    %62 = vrot.lane.b32.xlu0 %v60, 16
    %v63 = vpop.permute.xlu0 %62
    %vm65 = vcmask 130048
    %v66 = vsel %vm65, %v59, %v63
    %v67 = vand.u32 2147483647, %v66
    %vm68 = vcmp.le.f32.partialorder %v67, 0.7853982
    %vm69 = vcmp.lt.s32.totalorder %v66, 0
    %v70 = vand.u32 %v66, 2139095040
    %v71 = vshrl.u32 %v70, 23
    %v72 = vsub.s32 %v71, 127
    %v73 = vand.u32 2147483647, %v66
    %v74 = vand.u32 %v73, 8388607
    %v75 = vor.u32 %v74, 8388608
    %v76 = vsub.s32 0, %v75
    %v77 = vadd.s32 %v72, 1
    %vm78 = vcmp.gt.s32.totalorder %v77, 0
    %v79 = vsel %vm78, %v77, 0
    %v80 = vshrl.u32 %v79, 5
    %v81 = vand.u32 %v79, 31
    %v82 = vsub.s32 32, %v81
    %v83 = vshrl.u32 683565275, %v82
    %v84 = vshll.u32 683565275, %v81
    %v85 = vshrl.u32 2475754826, %v82
    %v86 = vor.u32 %v84, %v85
    %v87 = vshll.u32 2475754826, %v81
    %v88 = vshrl.u32 2131351028, %v82
    %v89 = vor.u32 %v87, %v88
    %v90 = vshll.u32 2131351028, %v81
    %v91 = vshrl.u32 2102212464, %v82
    %v92 = vor.u32 %v90, %v91
    %v93 = vshll.u32 2102212464, %v81
    %v94 = vshrl.u32 920167782, %v82
    %v95 = vor.u32 %v93, %v94
    %v96 = vshll.u32 920167782, %v81
    %v97 = vshrl.u32 1326507024, %v82
    %v98 = vor.u32 %v96, %v97
    %vm99 = vcmp.lt.s32.totalorder %v80, 1
    %vm100 = vcmp.lt.s32.totalorder %v80, 2
    %vm101 = vcmp.lt.s32.totalorder %v80, 3
    %vm102 = vcmp.lt.s32.totalorder %v80, 4
    %v103 = vsel %vm99, %v83, %v86
    %v104 = vsel %vm102, %v92, 2102212464
    %v105 = vsel %vm101, %v89, %v104
    %v106 = vsel %vm100, %v103, %v105
    %v107 = vsel %vm99, %v86, %v89
    %v108 = vsel %vm102, %v95, 920167782
    %v109 = vsel %vm101, %v92, %v108
    %v110 = vsel %vm100, %v107, %v109
    %v111 = vsel %vm99, %v89, %v92
    %v112 = vsel %vm102, %v98, 1326507024
    %v113 = vsel %vm101, %v95, %v112
    %v114 = vsel %vm100, %v111, %v113
    %v115 = vshll.u32 %v75, 8
    %v116 = vand.u32 %v115, 65535
    %v117 = vshrl.u32 %v115, 16
    %v118 = vand.u32 %v114, 65535
    %v119 = vshrl.u32 %v114, 16
    %v120 = vmul.u32 %v116, %v118
    %v121 = vmul.u32 %v116, %v119
    %v122 = vmul.u32 %v117, %v118
    %v123 = vmul.u32 %v117, %v119
    %v124 = vshll.u32 %v121, 16
    %v125 = vshrl.u32 %v121, 16
    %v126 = vshll.u32 %v122, 16
    %v127 = vshrl.u32 %v122, 16
    %vm128 = vc.u32 %v120, %v124
    %v129 = vsel %vm128, 1, 0
    %v130 = vadd.s32 %v120, %v124
    %v131 = vadd.s32 %v123, %v129
    %vm132 = vc.u32 %v130, %v126
    %v133 = vsel %vm132, 1, 0
    %v134 = vadd.s32 %v130, %v126
    %v135 = vadd.s32 %v131, %v133
    %v136 = vadd.s32 %v135, %v125
    %v137 = vadd.s32 %v136, %v127
    %v138 = vand.u32 %v115, 65535
    %v139 = vshrl.u32 %v115, 16
    %v140 = vand.u32 %v110, 65535
    %v141 = vshrl.u32 %v110, 16
    %v142 = vmul.u32 %v138, %v140
    %v143 = vmul.u32 %v138, %v141
    %v144 = vmul.u32 %v139, %v140
    %v145 = vmul.u32 %v139, %v141
    %v146 = vshll.u32 %v143, 16
    %v147 = vshrl.u32 %v143, 16
    %v148 = vshll.u32 %v144, 16
    %v149 = vshrl.u32 %v144, 16
    %vm150 = vc.u32 %v142, %v146
    %v151 = vsel %vm150, 1, 0
    %v152 = vadd.s32 %v142, %v146
    %v153 = vadd.s32 %v145, %v151
    %vm154 = vc.u32 %v152, %v148
    %v155 = vsel %vm154, 1, 0
    %v156 = vadd.s32 %v152, %v148
    %v157 = vadd.s32 %v153, %v155
    %v158 = vadd.s32 %v157, %v147
    %v159 = vadd.s32 %v158, %v149
    %v160 = vmul.u32 %v115, %v106
    %v161 = vadd.s32 %v137, %v156
    %vm162 = vc.u32 %v137, %v156
    %v163 = vadd.s32 %v159, 1
    %v164 = vsel %vm162, %v163, %v159
    %v165 = vadd.s32 %v160, %v164
    %v166 = vadd.s32 %v165, 536870912
    %v167 = vshrl.u32 %v166, 30
    %v168 = vshll.u32 %v167, 30
    %v169 = vsub.s32 %v165, %v168
    %vm170 = vcmp.lt.s32.totalorder %v169, 0
    %v171 = vsub.s32 0, %v169
    %v172 = vsel %vm170, %v171, %v169
    %v173 = vclz %v172
    %v174 = vsub.s32 %v173, 2
    %vm175 = vcmp.gt.s32.totalorder 0, %v174
    %v176 = vsel %vm175, 0, %v174
    %v177 = vsub.s32 32, %v176
    %v178 = vshll.u32 %v169, %v176
    %v179 = vshrl.u32 %v161, %v177
    %v180 = vor.u32 %v178, %v179
    %v181 = vsub.s32 4294967266, %v176
    %v182 = vadd.s32 %v181, 127
    %v183 = vshll.u32 %v182, 23
    %v184 = vor.u32 4788187, %v183
    %v185 = vand.u32 2147483647, %v184
    %v187 = vcvt.s32.f32 %v180
    %v188 = vmul.f32 %v187, %v185
    %v189 = vxor.u32 %v188, 2147483648
    %v190 = vsel %vm69, %v189, %v188
    %v191 = vsub.s32 4, %v167
    %v192 = vsel %vm69, %v191, %v167
    %v193 = vsel %vm68, %v66, %v190
    %v194 = vsel %vm68, 0, %v192
    %v195 = vmul.f32 %v193, %v193
    %v196 = vmul.f32 %v195, -0.001358992
    %v197 = vadd.f32 %v196, 0.041655596
    %v198 = vmul.f32 %v195, %v197
    %v199 = vadd.f32 %v198, -0.4999988
    %v200 = vmul.f32 %v195, %v199
    %v201 = vadd.f32 1.0, %v200
    %v202 = vmul.f32 %v193, %v193
    %v203 = vmul.f32 %v202, -0.00019511016
    %v204 = vadd.f32 %v203, 0.008332121
    %v205 = vmul.f32 %v202, %v204
    %v206 = vadd.f32 %v205, -0.16666654
    %v207 = vmul.f32 %v202, %v206
    %v208 = vadd.f32 %v207, 1.0
    %v209 = vmul.f32 %v208, %v193
    %vm210 = vweird.f32 %v66
    %v211 = vadd.s32 %v194, 3
    %v212 = vand.u32 %v211, 3
    %vm213 = vcmp.lt.s32.totalorder %v212, 2
    %vm214 = vcmp.eq.s32.totalorder %v212, 0
    %v215 = vxor.u32 %v209, 2147483648
    %v216 = vsel %vm214, %v201, %v215
    %vm217 = vcmp.eq.s32.totalorder %v212, 2
    %v218 = vxor.u32 %v201, 2147483648
    %v219 = vsel %vm217, %v218, %v209
    %v220 = vsel %vm213, %v216, %v219
    %v221 = vsel %vm210, nan, %v220
    %v222 = vpack.c.bf16 %v221, %v221
    %v223 = vld [vmem:[#allocation5] sm:$0xf]
    %v224 = vld [vmem:[#allocation5 + $0x4] sm:$0xf]
    %v225 = vld [vmem:[#allocation5 + $0x8] sm:$0xf]
    %v226 = vld [vmem:[#allocation5 + $0xc] sm:$0xf]
    %v227 = vld [vmem:[#allocation7] sm:$0x1]
    %v228 = vperm.slane %v227, 0
    %v233 = vunpack.c.l.b16 %v223
    %v234 = vunpack.c.l.b16 %v224
    %v235 = vunpack.c.l.b16 %v225
    %v236 = vunpack.c.l.b16 %v226
    %v237 = vpack.c.b16 %v234, %v233
    %v238 = vpack.c.b16 %v236, %v235
    %vm241 = vcmask 261120
    %v243 = vsel %vm241, %v222, 0
    %245 = vmatpush.bf16.msra.mxu0 0
    %246 = vmatpush.bf16.msra.mxu0 0
    %247 = vmatpush.bf16.msra.mxu0 0
    %248 = vmatpush.bf16.msra.mxu0 0
    %249 = vmatpush.bf16.msra.mxu0 0
    %250 = vmatpush.bf16.msra.mxu0 0
    %251 = vmatpush.bf16.msra.mxu0 %v238
    %252 = vmatpush.bf16.msra.mxu0 %v237
    %253 = vmatmul.bf16.gmra.mxu0 %v243
    %v254 = vpop.f32.mrf.mxu0
    %v255 = vadd.f32 %v228, %v254
    %v256 = vpop.f32.mrf.mxu0
    %257 = vdwg.mxu0
    %v258 = vmax.f32 %v255, 0.0
    %v259 = vmul.f32 %v258, %v258
    %v260 = vpack.c.bf16 %v259, %v259
    %v261 = vld [vmem:[#allocation5 + $0x10] sm:$0xf]
    %v262 = vld [vmem:[#allocation5 + $0x14] sm:$0xf]
    %v263 = vld [vmem:[#allocation5 + $0x18] sm:$0xf]
    %v264 = vld [vmem:[#allocation5 + $0x1c] sm:$0xf]
    %v265 = vld [vmem:[#allocation5 + $0x20] sm:$0xf]
    %v266 = vld [vmem:[#allocation5 + $0x24] sm:$0xf]
    %v267 = vld [vmem:[#allocation5 + $0x28] sm:$0xf]
    %v268 = vld [vmem:[#allocation5 + $0x2c] sm:$0xf]
    %v269 = vld [vmem:[#allocation5 + $0x30] sm:$0xf]
    %v270 = vld [vmem:[#allocation5 + $0x34] sm:$0xf]
    %v271 = vld [vmem:[#allocation5 + $0x38] sm:$0xf]
    %v272 = vld [vmem:[#allocation5 + $0x3c] sm:$0xf]
    %v273 = vld [vmem:[#allocation5 + $0x40] sm:$0xf]
    %v274 = vld [vmem:[#allocation5 + $0x44] sm:$0xf]
    %v275 = vld [vmem:[#allocation5 + $0x48] sm:$0xf]
    %v276 = vld [vmem:[#allocation5 + $0x4c] sm:$0xf]
    %v277 = vld [vmem:[#allocation7 + $0x1] sm:$0x1]
    %v278 = vperm.slane %v277, 0
    %v295 = vunpack.c.l.b16 %v261
    %v296 = vunpack.c.l.b16 %v262
    %v297 = vunpack.c.l.b16 %v263
    %v298 = vunpack.c.l.b16 %v264
    %v299 = vunpack.c.l.b16 %v265
    %v300 = vunpack.c.l.b16 %v266
    %v301 = vunpack.c.l.b16 %v267
    %v302 = vunpack.c.l.b16 %v268
    %v303 = vunpack.c.l.b16 %v269
    %v304 = vunpack.c.l.b16 %v270
    %v305 = vunpack.c.l.b16 %v271
    %v306 = vunpack.c.l.b16 %v272
    %v307 = vunpack.c.l.b16 %v273
    %v308 = vunpack.c.l.b16 %v274
    %v309 = vunpack.c.l.b16 %v275
    %v310 = vunpack.c.l.b16 %v276
    %v311 = vpack.c.b16 %v296, %v295
    %v312 = vpack.c.b16 %v298, %v297
    %v313 = vpack.c.b16 %v300, %v299
    %v314 = vpack.c.b16 %v302, %v301
    %v315 = vpack.c.b16 %v304, %v303
    %v316 = vpack.c.b16 %v306, %v305
    %v317 = vpack.c.b16 %v308, %v307
    %v318 = vpack.c.b16 %v310, %v309
    %327 = vmatpush.bf16.msra.mxu0 %v318
    %328 = vmatpush.bf16.msra.mxu0 %v317
    %329 = vmatpush.bf16.msra.mxu0 %v316
    %330 = vmatpush.bf16.msra.mxu0 %v315
    %331 = vmatpush.bf16.msra.mxu0 %v314
    %332 = vmatpush.bf16.msra.mxu0 %v313
    %333 = vmatpush.bf16.msra.mxu0 %v312
    %334 = vmatpush.bf16.msra.mxu0 %v311
    %335 = vmatmul.bf16.gmra.mxu0 %v260
    %v336 = vpop.f32.mrf.mxu0
    %v337 = vadd.f32 %v278, %v336
    %v338 = vpop.f32.mrf.mxu0
    %339 = vdwg.mxu0
    %v340 = vmax.f32 %v337, 0.0
    %v341 = vmul.f32 %v340, %v340
    %v342 = vpack.c.bf16 %v341, %v341
    %v343 = vld [vmem:[#allocation5 + $0x50] sm:$0xf]
    %v344 = vld [vmem:[#allocation5 + $0x54] sm:$0xf]
    %v345 = vld [vmem:[#allocation5 + $0x58] sm:$0xf]
    %v346 = vld [vmem:[#allocation5 + $0x5c] sm:$0xf]
    %v347 = vld [vmem:[#allocation5 + $0x60] sm:$0xf]
    %v348 = vld [vmem:[#allocation5 + $0x64] sm:$0xf]
    %v349 = vld [vmem:[#allocation5 + $0x68] sm:$0xf]
    %v350 = vld [vmem:[#allocation5 + $0x6c] sm:$0xf]
    %v351 = vld [vmem:[#allocation5 + $0x70] sm:$0xf]
    %v352 = vld [vmem:[#allocation5 + $0x74] sm:$0xf]
    %v353 = vld [vmem:[#allocation5 + $0x78] sm:$0xf]
    %v354 = vld [vmem:[#allocation5 + $0x7c] sm:$0xf]
    %v355 = vld [vmem:[#allocation5 + $0x80] sm:$0xf]
    %v356 = vld [vmem:[#allocation5 + $0x84] sm:$0xf]
    %v357 = vld [vmem:[#allocation5 + $0x88] sm:$0xf]
    %v358 = vld [vmem:[#allocation5 + $0x8c] sm:$0xf]
    %v359 = vld [vmem:[#allocation7 + $0x2] sm:$0x1]
    %v360 = vperm.slane %v359, 0
    %v377 = vunpack.c.l.b16 %v343
    %v378 = vunpack.c.l.b16 %v344
    %v379 = vunpack.c.l.b16 %v345
    %v380 = vunpack.c.l.b16 %v346
    %v381 = vunpack.c.l.b16 %v347
    %v382 = vunpack.c.l.b16 %v348
    %v383 = vunpack.c.l.b16 %v349
    %v384 = vunpack.c.l.b16 %v350
    %v385 = vunpack.c.l.b16 %v351
    %v386 = vunpack.c.l.b16 %v352
    %v387 = vunpack.c.l.b16 %v353
    %v388 = vunpack.c.l.b16 %v354
    %v389 = vunpack.c.l.b16 %v355
    %v390 = vunpack.c.l.b16 %v356
    %v391 = vunpack.c.l.b16 %v357
    %v392 = vunpack.c.l.b16 %v358
    %v393 = vpack.c.b16 %v378, %v377
    %v394 = vpack.c.b16 %v380, %v379
    %v395 = vpack.c.b16 %v382, %v381
    %v396 = vpack.c.b16 %v384, %v383
    %v397 = vpack.c.b16 %v386, %v385
    %v398 = vpack.c.b16 %v388, %v387
    %v399 = vpack.c.b16 %v390, %v389
    %v400 = vpack.c.b16 %v392, %v391
    %409 = vmatpush.bf16.msra.mxu0 %v400
    %410 = vmatpush.bf16.msra.mxu0 %v399
    %411 = vmatpush.bf16.msra.mxu0 %v398
    %412 = vmatpush.bf16.msra.mxu0 %v397
    %413 = vmatpush.bf16.msra.mxu0 %v396
    %414 = vmatpush.bf16.msra.mxu0 %v395
    %415 = vmatpush.bf16.msra.mxu0 %v394
    %416 = vmatpush.bf16.msra.mxu0 %v393
    %417 = vmatmul.bf16.gmra.mxu0 %v342
    %v418 = vpop.f32.mrf.mxu0
    %v419 = vadd.f32 %v360, %v418
    %v420 = vpop.f32.mrf.mxu0
    %421 = vdwg.mxu0
    %v422 = vpack.c.bf16 %v419, %v419
    %423 = vst [vmem:[#allocation8] sm:$0xf] %v422
    // Predicated region
    $region26: #{tpu_custom_call.1} parent=1 // pred_check
      _
    $region27: #{tpu_custom_call.1} parent=1 // pred_check_branch
      %425 = sbr.rel (0) target = $region29
    $region28: #{tpu_custom_call.1} parent=1 // pred_region
      %427 = vsyncadd [#allocation4], 0
      %s429 = sshll.u32 [#allocation8], 4
      %s430 = int_to_ptr.vmem [resolvable:$true] %s429
      %s431 = sshll.u32 %s3, 4
      %s432 = int_to_ptr.hbm [resolvable:$true] %s431
      %434 = dma.vmem_to_hbm [thread:$0]  %s430, 64, %s432, [#allocation4]
    $region29: #{tpu_custom_call.1} parent=1 // pred_fallthru
      _
    // Predicated region
    $region30: #{tpu_custom_call.1} parent=1 // pred_check
      _
    $region31: #{tpu_custom_call.1} parent=1 // pred_check_branch
      %436 = sbr.rel (0) target = $region33
    $region32: #{tpu_custom_call.1} parent=1 // pred_region
      %438 = dma.done [#allocation4], 64
    $region33: #{tpu_custom_call.1} parent=1 // pred_fallthru
      _
    %439 = vsyncpa [#allocation3], 1
    %440 = vsyncpa [#allocation6], 1
    %441 = vsyncpa [#allocation4], 1

</llo_original>
